<compile_context>
chip_gen: v5e
topology: v5e:2x2
jax: 0.10.0
libtpu: 0.0.40
codegen_flags: <defaults>
</compile_context>

<pallas_src>
import functools

import jax
import jax.numpy as jnp
from jax import lax
from jax.experimental import pallas as pl
from jax.experimental.pallas import tpu as pltpu

LANES = 128
SUBLANES = 8
CHUNK_ROWS = 512          # compute chunk inside a DMA block (256 KiB f32 temps)
PAD_LOGIT = -1.0e4        # sigmoid -> 0, bce -> 0: masked/padded elems add 0


def _round_up(x, m):
    return (x + m - 1) // m * m


def _chip_config():
    """Returns (two_tensorcores, max_tile_rows, vmem_limit_bytes)."""
    kind = ""
    try:
        dev = jax.devices()[0]
        if dev.platform == "tpu":
            kind = dev.device_kind.lower()
    except Exception:  # defensive: never fail planning on an odd backend
        pass
    # Multi-TensorCore chips get a size-2 "parallel" leading grid axis.
    two_tc = any(tag in kind for tag in ("v3", "v4", "v5p", "7"))
    # v5e: smaller default scoped VMEM -> cap the block there, go bigger elsewhere.
    is_v5e = ("v5 lite" in kind) or ("v5e" in kind) or ("v5lite" in kind)
    max_tile_rows = 4096 if is_v5e else 8192
    # v7x only has 64 MiB physical VMEM per TensorCore -> leave headroom.
    vmem_limit = (48 << 20) if "7" in kind else (64 << 20)
    return two_tc, max_tile_rows, vmem_limit


def _dice_bce_kernel(x_ref, t_ref, pt_ref, ps_ref, ts_ref, bce_ref, *,
                     tile_rows, chunk_rows, valid_rows, need_mask):
    c = pl.program_id(0)          # core-split ("parallel") axis
    i = pl.program_id(1)          # reduction ("arbitrary") axis

    @pl.when(i == 0)
    def _init():
        pt_ref[...] = jnp.zeros_like(pt_ref)
        ps_ref[...] = jnp.zeros_like(ps_ref)
        ts_ref[...] = jnp.zeros_like(ts_ref)
        bce_ref[...] = jnp.zeros_like(bce_ref)

    block_row0 = (c * pl.num_programs(1) + i) * tile_rows
    n_chunks = tile_rows // chunk_rows

    if need_mask:
        row_iota = lax.broadcasted_iota(jnp.int32, (chunk_rows, LANES), 0)

    def fold(v):
        # (chunk_rows, 128) -> (8, 128) partial sums with pure VPU adds; the
        # cross-lane/sublane reduction runs once in the tiny JAX epilogue.
        return jnp.sum(v.reshape(chunk_rows // SUBLANES, SUBLANES, LANES), axis=0)

    def process(r0):
        x = x_ref[pl.ds(r0, chunk_rows), :].astype(jnp.float32)
        t = t_ref[pl.ds(r0, chunk_rows), :].astype(jnp.float32)
        if need_mask:
            valid = (block_row0 + r0 + row_iota) < valid_rows
            x = jnp.where(valid, x, PAD_LOGIT)
            t = jnp.where(valid, t, 0.0)
        # Logits-space sigmoid + BCE sharing a single exp.
        e = jnp.exp(-jnp.abs(x))
        # Kept as an exact divide to preserve 1e-5 agreement with the reference;
        # pl.reciprocal(1.0 + e, approx=True) is a further (EUP-slot) option.
        inv = 1.0 / (1.0 + e)
        p = jnp.where(x >= 0, inv, e * inv)                  # sigmoid(x)
        bce_el = jnp.maximum(x, 0.0) - x * t + jnp.log1p(e)  # BCE with logits
        pt_ref[...] += fold(p * t)[None]
        ps_ref[...] += fold(p)[None]
        ts_ref[...] += fold(t)[None]
        bce_ref[...] += fold(bce_el)[None]

    if n_chunks == 1:
        process(0)
    else:
        def body(ci, carry):
            process(pl.multiple_of(ci * chunk_rows, chunk_rows))
            return carry
        lax.fori_loop(0, n_chunks, body, 0, unroll=n_chunks <= 8)


def dice_bce_loss(inputs, targets, bce_weight=0.5, dice_weight=0.5, smooth=1.0):
    """Pallas implementation of DiceBCELoss.forward (from_logits=True).

    Inputs/targets stream in their native dtype (bf16 / int8 targets are fine
    and halve / quarter HBM traffic); all math is done in f32 in-kernel.
    """
    assert inputs.shape == targets.shape
    n = inputs.size
    assert n > 0

    x = inputs.reshape(-1)
    t = targets.reshape(-1)

    rows = pl.cdiv(n, LANES)
    if n != rows * LANES:
        # Rare path (numel not a multiple of 128): lane-pad so the (rows, 128)
        # view exists.  Padded logits of -1e4 / targets of 0 contribute zero.
        # TODO(synk): this is a full host-side copy; ragged callers should
        # pre-pad once instead of per loss call.
        pad = rows * LANES - n
        x = jnp.pad(x, (0, pad), constant_values=PAD_LOGIT)
        t = jnp.pad(t, (0, pad))
    x = x.reshape(rows, LANES)
    t = t.reshape(rows, LANES)

    two_tc, max_tile_rows, vmem_limit = _chip_config()

    def plan(ncores):
        per_core = pl.cdiv(rows, ncores)
        steps = pl.cdiv(per_core, max_tile_rows)
        raw = pl.cdiv(per_core, steps)
        if raw <= CHUNK_ROWS:
            tile_rows = _round_up(raw, SUBLANES)
        else:
            tile_rows = _round_up(raw, CHUNK_ROWS)
        return steps, tile_rows

    ncores = 2 if two_tc else 1
    steps, tile_rows = plan(ncores)
    if ncores > 1 and (ncores - 1) * steps * tile_rows >= rows:
        # Too small to give every core in-bounds work: fall back to one core.
        ncores = 1
        steps, tile_rows = plan(ncores)
    chunk_rows = min(tile_rows, CHUNK_ROWS)
    need_mask = ncores * steps * tile_rows != rows

    kernel = functools.partial(
        _dice_bce_kernel, tile_rows=tile_rows, chunk_rows=chunk_rows,
        valid_rows=rows, need_mask=need_mask)

    part_shape = jax.ShapeDtypeStruct((ncores, SUBLANES, LANES), jnp.float32)
    part_spec = pl.BlockSpec((1, SUBLANES, LANES), lambda c, i: (c, 0, 0))
    in_spec = pl.BlockSpec((tile_rows, LANES), lambda c, i: (c * steps + i, 0))

    pt_p, ps_p, ts_p, bce_p = pl.pallas_call(
        kernel,
        out_shape=(part_shape,) * 4,
        grid_spec=pltpu.PrefetchScalarGridSpec(
            num_scalar_prefetch=0,
            grid=(ncores, steps),
            in_specs=[in_spec, in_spec],
            out_specs=[part_spec] * 4,
        ),
        compiler_params=pltpu.CompilerParams(
            dimension_semantics=("parallel", "arbitrary"),
            vmem_limit_bytes=vmem_limit),
    )(x, t)

    # Tiny epilogue: reduce (ncores, 8, 128) partials + scalar combination.
    intersection = jnp.sum(pt_p)
    p_sum = jnp.sum(ps_p)
    t_sum = jnp.sum(ts_p)
    bce = jnp.sum(bce_p) / jnp.float32(n)
    dice_loss = 1.0 - (2.0 * intersection + smooth) / (p_sum + t_sum + smooth)
    return bce_weight * bce + dice_weight * dice_loss


def _reference_dice_bce(inputs, targets, bce_weight=0.5, dice_weight=0.5, smooth=1.0):
    p = jax.nn.sigmoid(inputs.astype(jnp.float32)).reshape(-1)
    t = targets.astype(jnp.float32).reshape(-1)
    intersection = jnp.sum(p * t)
    dice_loss = 1.0 - (2.0 * intersection + smooth) / (jnp.sum(p) + jnp.sum(t) + smooth)
    logp = jnp.maximum(jnp.log(p), -100.0)
    log1mp = jnp.maximum(jnp.log1p(-p), -100.0)
    bce = jnp.mean(-(t * logp + (1.0 - t) * log1mp))
    return bce_weight * bce + dice_weight * dice_loss


if __name__ == "__main__":
    key = jax.random.PRNGKey(0)
    k1, k2 = jax.random.split(key)

    # Segmentation-mask-like inputs: logits and binary targets, NCHW.
    inputs = jax.random.normal(k1, (2, 4, 16, 16), dtype=jnp.float32)
    targets = (jax.random.uniform(k2, (2, 4, 16, 16)) > 0.5).astype(jnp.float32)

    loss = dice_bce_loss(inputs, targets, bce_weight=0.5, dice_weight=0.5, smooth=1.0)
    loss = jax.block_until_ready(loss)

    ref = _reference_dice_bce(inputs, targets)
    assert jnp.allclose(loss, ref, rtol=1e-5, atol=1e-5), (loss, ref)

    print("KERNEL_OK")
</pallas_src>

<mosaic_0001>
module attributes {stable_mosaic.version = 11 : i64} {
  func.func @_dice_bce_kernel(%arg0: i32, %arg1: i32, %arg2: memref<16x128xf32, #tpu.memory_space<vmem>>, %arg3: memref<16x128xf32, #tpu.memory_space<vmem>>, %arg4: memref<1x8x128xf32, #tpu.memory_space<vmem>>, %arg5: memref<1x8x128xf32, #tpu.memory_space<vmem>>, %arg6: memref<1x8x128xf32, #tpu.memory_space<vmem>>, %arg7: memref<1x8x128xf32, #tpu.memory_space<vmem>>) attributes {dimension_semantics = [#tpu.dimension_semantics<parallel>, #tpu.dimension_semantics<arbitrary>], iteration_bounds = array<i64: 1, 1>, scalar_prefetch = 0 : i64, scratch_operands = 0 : i64, tpu.core_type = #tpu.core_type<tc>, window_params = [{transform_indices = @transform_0, window_bounds = array<i64: 16, 128>}, {transform_indices = @transform_1, window_bounds = array<i64: 16, 128>}, {transform_indices = @transform_2, window_bounds = array<i64: 1, 8, 128>}, {transform_indices = @transform_3, window_bounds = array<i64: 1, 8, 128>}, {transform_indices = @transform_4, window_bounds = array<i64: 1, 8, 128>}, {transform_indices = @transform_5, window_bounds = array<i64: 1, 8, 128>}]} {
    %c0_i32 = arith.constant 0 : i32
    %0 = arith.cmpi eq, %arg1, %c0_i32 : i32
    %1 = arith.extui %0 : i1 to i32
    %c0_i32_0 = arith.constant 0 : i32
    %2 = arith.cmpi ne, %1, %c0_i32_0 : i32
    scf.if %2 {
      %cst_36 = arith.constant 0.000000e+00 : f32
      %48 = vector.broadcast %cst_36 : f32 to vector<1x8x128xf32>
      %c0_37 = arith.constant 0 : index
      %c0_38 = arith.constant 0 : index
      %c0_39 = arith.constant 0 : index
      %49 = vector.load %arg4[%c0_37, %c0_38, %c0_39] : memref<1x8x128xf32, #tpu.memory_space<vmem>>, vector<1x8x128xf32>
      tpu.vector_store %arg4[%c0_37, %c0_38, %c0_39], %48 {strides = array<i32>} : memref<1x8x128xf32, #tpu.memory_space<vmem>>, vector<1x8x128xf32>,
      %cst_40 = arith.constant 0.000000e+00 : f32
      %50 = vector.broadcast %cst_40 : f32 to vector<1x8x128xf32>
      %c0_41 = arith.constant 0 : index
      %c0_42 = arith.constant 0 : index
      %c0_43 = arith.constant 0 : index
      %51 = vector.load %arg5[%c0_41, %c0_42, %c0_43] : memref<1x8x128xf32, #tpu.memory_space<vmem>>, vector<1x8x128xf32>
      tpu.vector_store %arg5[%c0_41, %c0_42, %c0_43], %50 {strides = array<i32>} : memref<1x8x128xf32, #tpu.memory_space<vmem>>, vector<1x8x128xf32>,
      %cst_44 = arith.constant 0.000000e+00 : f32
      %52 = vector.broadcast %cst_44 : f32 to vector<1x8x128xf32>
      %c0_45 = arith.constant 0 : index
      %c0_46 = arith.constant 0 : index
      %c0_47 = arith.constant 0 : index
      %53 = vector.load %arg6[%c0_45, %c0_46, %c0_47] : memref<1x8x128xf32, #tpu.memory_space<vmem>>, vector<1x8x128xf32>
      tpu.vector_store %arg6[%c0_45, %c0_46, %c0_47], %52 {strides = array<i32>} : memref<1x8x128xf32, #tpu.memory_space<vmem>>, vector<1x8x128xf32>,
      %cst_48 = arith.constant 0.000000e+00 : f32
      %54 = vector.broadcast %cst_48 : f32 to vector<1x8x128xf32>
      %c0_49 = arith.constant 0 : index
      %c0_50 = arith.constant 0 : index
      %c0_51 = arith.constant 0 : index
      %55 = vector.load %arg7[%c0_49, %c0_50, %c0_51] : memref<1x8x128xf32, #tpu.memory_space<vmem>>, vector<1x8x128xf32>
      tpu.vector_store %arg7[%c0_49, %c0_50, %c0_51], %54 {strides = array<i32>} : memref<1x8x128xf32, #tpu.memory_space<vmem>>, vector<1x8x128xf32>,
    } else {
    }
    %c0 = arith.constant 0 : index
    %c0_1 = arith.constant 0 : index
    %3 = vector.load %arg2[%c0, %c0_1] : memref<16x128xf32, #tpu.memory_space<vmem>>, vector<16x128xf32>
    %c0_2 = arith.constant 0 : index
    %c0_3 = arith.constant 0 : index
    %4 = vector.load %arg3[%c0_2, %c0_3] : memref<16x128xf32, #tpu.memory_space<vmem>>, vector<16x128xf32>
    %5 = math.absf %3 : vector<16x128xf32>
    %cst = arith.constant 0.000000e+00 : f32
    %6 = vector.broadcast %cst : f32 to vector<16x128xf32>
    %7 = arith.subf %6, %5 : vector<16x128xf32>
    %8 = math.exp %7 : vector<16x128xf32>
    %cst_4 = arith.constant 1.000000e+00 : f32
    %9 = vector.broadcast %cst_4 : f32 to vector<16x128xf32>
    %10 = arith.addf %9, %8 : vector<16x128xf32>
    %cst_5 = arith.constant 1.000000e+00 : f32
    %11 = vector.broadcast %cst_5 : f32 to vector<16x128xf32>
    %12 = arith.divf %11, %10 : vector<16x128xf32>
    %cst_6 = arith.constant 0.000000e+00 : f32
    %13 = vector.broadcast %cst_6 : f32 to vector<16x128xf32>
    %14 = arith.cmpf oge, %3, %13 : vector<16x128xf32>
    %15 = arith.mulf %8, %12 : vector<16x128xf32>
    %16 = arith.select %14, %12, %15 : vector<16x128xi1>, vector<16x128xf32>
    %cst_7 = arith.constant 0.000000e+00 : f32
    %17 = vector.broadcast %cst_7 : f32 to vector<16x128xf32>
    %18 = arith.maximumf %3, %17 : vector<16x128xf32>
    %19 = arith.mulf %3, %4 : vector<16x128xf32>
    %20 = arith.subf %18, %19 : vector<16x128xf32>
    %21 = math.log1p %8 : vector<16x128xf32>
    %22 = arith.addf %20, %21 : vector<16x128xf32>
    %c0_8 = arith.constant 0 : index
    %c0_9 = arith.constant 0 : index
    %c0_10 = arith.constant 0 : index
    %23 = vector.load %arg4[%c0_8, %c0_9, %c0_10] : memref<1x8x128xf32, #tpu.memory_space<vmem>>, vector<1x8x128xf32>
    %24 = arith.mulf %16, %4 : vector<16x128xf32>
    %25 = vector.shape_cast %24 : vector<16x128xf32> to vector<2x8x128xf32>
    %cst_11 = arith.constant dense<0.000000e+00> : vector<8x128xf32>
    %26 = vector.multi_reduction <add>, %25, %cst_11 [0] : vector<2x8x128xf32> to vector<8x128xf32>
    %27 = vector.shape_cast %26 : vector<8x128xf32> to vector<1x8x128xf32>
    %28 = arith.addf %23, %27 : vector<1x8x128xf32>
    %c0_12 = arith.constant 0 : index
    %c0_13 = arith.constant 0 : index
    %c0_14 = arith.constant 0 : index
    %29 = vector.load %arg4[%c0_12, %c0_13, %c0_14] : memref<1x8x128xf32, #tpu.memory_space<vmem>>, vector<1x8x128xf32>
    tpu.vector_store %arg4[%c0_12, %c0_13, %c0_14], %28 {strides = array<i32>} : memref<1x8x128xf32, #tpu.memory_space<vmem>>, vector<1x8x128xf32>,
    %c0_15 = arith.constant 0 : index
    %c0_16 = arith.constant 0 : index
    %c0_17 = arith.constant 0 : index
    %30 = vector.load %arg5[%c0_15, %c0_16, %c0_17] : memref<1x8x128xf32, #tpu.memory_space<vmem>>, vector<1x8x128xf32>
    %31 = vector.shape_cast %16 : vector<16x128xf32> to vector<2x8x128xf32>
    %cst_18 = arith.constant dense<0.000000e+00> : vector<8x128xf32>
    %32 = vector.multi_reduction <add>, %31, %cst_18 [0] : vector<2x8x128xf32> to vector<8x128xf32>
    %33 = vector.shape_cast %32 : vector<8x128xf32> to vector<1x8x128xf32>
    %34 = arith.addf %30, %33 : vector<1x8x128xf32>
    %c0_19 = arith.constant 0 : index
    %c0_20 = arith.constant 0 : index
    %c0_21 = arith.constant 0 : index
    %35 = vector.load %arg5[%c0_19, %c0_20, %c0_21] : memref<1x8x128xf32, #tpu.memory_space<vmem>>, vector<1x8x128xf32>
    tpu.vector_store %arg5[%c0_19, %c0_20, %c0_21], %34 {strides = array<i32>} : memref<1x8x128xf32, #tpu.memory_space<vmem>>, vector<1x8x128xf32>,
    %c0_22 = arith.constant 0 : index
    %c0_23 = arith.constant 0 : index
    %c0_24 = arith.constant 0 : index
    %36 = vector.load %arg6[%c0_22, %c0_23, %c0_24] : memref<1x8x128xf32, #tpu.memory_space<vmem>>, vector<1x8x128xf32>
    %37 = vector.shape_cast %4 : vector<16x128xf32> to vector<2x8x128xf32>
    %cst_25 = arith.constant dense<0.000000e+00> : vector<8x128xf32>
    %38 = vector.multi_reduction <add>, %37, %cst_25 [0] : vector<2x8x128xf32> to vector<8x128xf32>
    %39 = vector.shape_cast %38 : vector<8x128xf32> to vector<1x8x128xf32>
    %40 = arith.addf %36, %39 : vector<1x8x128xf32>
    %c0_26 = arith.constant 0 : index
    %c0_27 = arith.constant 0 : index
    %c0_28 = arith.constant 0 : index
    %41 = vector.load %arg6[%c0_26, %c0_27, %c0_28] : memref<1x8x128xf32, #tpu.memory_space<vmem>>, vector<1x8x128xf32>
    tpu.vector_store %arg6[%c0_26, %c0_27, %c0_28], %40 {strides = array<i32>} : memref<1x8x128xf32, #tpu.memory_space<vmem>>, vector<1x8x128xf32>,
    %c0_29 = arith.constant 0 : index
    %c0_30 = arith.constant 0 : index
    %c0_31 = arith.constant 0 : index
    %42 = vector.load %arg7[%c0_29, %c0_30, %c0_31] : memref<1x8x128xf32, #tpu.memory_space<vmem>>, vector<1x8x128xf32>
    %43 = vector.shape_cast %22 : vector<16x128xf32> to vector<2x8x128xf32>
    %cst_32 = arith.constant dense<0.000000e+00> : vector<8x128xf32>
    %44 = vector.multi_reduction <add>, %43, %cst_32 [0] : vector<2x8x128xf32> to vector<8x128xf32>
    %45 = vector.shape_cast %44 : vector<8x128xf32> to vector<1x8x128xf32>
    %46 = arith.addf %42, %45 : vector<1x8x128xf32>
    %c0_33 = arith.constant 0 : index
    %c0_34 = arith.constant 0 : index
    %c0_35 = arith.constant 0 : index
    %47 = vector.load %arg7[%c0_33, %c0_34, %c0_35] : memref<1x8x128xf32, #tpu.memory_space<vmem>>, vector<1x8x128xf32>
    tpu.vector_store %arg7[%c0_33, %c0_34, %c0_35], %46 {strides = array<i32>} : memref<1x8x128xf32, #tpu.memory_space<vmem>>, vector<1x8x128xf32>,
    return
  }
  func.func @transform_0(%arg0: i32, %arg1: i32) -> (i32, i32) {
    %c1_i32 = arith.constant 1 : i32
    %0 = arith.muli %arg0, %c1_i32 : i32
    %1 = arith.addi %0, %arg1 : i32
    %c0_i32 = arith.constant 0 : i32
    %c0_i32_0 = arith.constant 0 : i32
    return %1, %c0_i32 : i32, i32
  }
  func.func @transform_1(%arg0: i32, %arg1: i32) -> (i32, i32) {
    %c1_i32 = arith.constant 1 : i32
    %0 = arith.muli %arg0, %c1_i32 : i32
    %1 = arith.addi %0, %arg1 : i32
    %c0_i32 = arith.constant 0 : i32
    %c0_i32_0 = arith.constant 0 : i32
    return %1, %c0_i32 : i32, i32
  }
  func.func @transform_2(%arg0: i32, %arg1: i32) -> (i32, i32, i32) {
    %c0_i32 = arith.constant 0 : i32
    %c0_i32_0 = arith.constant 0 : i32
    %c0_i32_1 = arith.constant 0 : i32
    return %arg0, %c0_i32, %c0_i32_0 : i32, i32, i32
  }
  func.func @transform_3(%arg0: i32, %arg1: i32) -> (i32, i32, i32) {
    %c0_i32 = arith.constant 0 : i32
    %c0_i32_0 = arith.constant 0 : i32
    %c0_i32_1 = arith.constant 0 : i32
    return %arg0, %c0_i32, %c0_i32_0 : i32, i32, i32
  }
  func.func @transform_4(%arg0: i32, %arg1: i32) -> (i32, i32, i32) {
    %c0_i32 = arith.constant 0 : i32
    %c0_i32_0 = arith.constant 0 : i32
    %c0_i32_1 = arith.constant 0 : i32
    return %arg0, %c0_i32, %c0_i32_0 : i32, i32, i32
  }
  func.func @transform_5(%arg0: i32, %arg1: i32) -> (i32, i32, i32) {
    %c0_i32 = arith.constant 0 : i32
    %c0_i32_0 = arith.constant 0 : i32
    %c0_i32_1 = arith.constant 0 : i32
    return %arg0, %c0_i32, %c0_i32_0 : i32, i32, i32
  }
}

</mosaic_0001>

<llo_original>
// kernel: tpu_custom_call.1
$region0: #{tpu_custom_call.1}
  #allocation0 [shape = 'u32[]', space=smem, size = 0x4, offset = 0x4, fixed_abs, tag = 'smem constant byte address 0x4 - core index']
  #allocation1 [shape = 'u32[72,128]{1,0:T(1,128)}', space=vmem, size = 0x9000, scoped, tag = 'internal scratch']
  %s0 = inlined_call_operand.hbm [shape: f32[16,128], index: 0, kind: input, shape index: {}]
  %s1 = inlined_call_operand.hbm [shape: f32[16,128], index: 1, kind: input, shape index: {}]
  %s2 = inlined_call_operand.hbm [shape: f32[1,8,128], index: 2, kind: output, shape index: {0}]
  %s3 = inlined_call_operand.hbm [shape: f32[1,8,128], index: 3, kind: output, shape index: {1}]
  %s4 = inlined_call_operand.hbm [shape: f32[1,8,128], index: 4, kind: output, shape index: {2}]
  %s5 = inlined_call_operand.hbm [shape: f32[1,8,128], index: 5, kind: output, shape index: {3}]
  %6 = xla_tuple %s2, %s3, %s4, %s5
  %s7 = sld [smem:[#allocation0]]
  $region54: #{tpu_custom_call.1} parent=0
    _
  %s9 = ssub.s32 1, %s7
  %s10 = scalar_select 0, %s9, %s7
  $region1: #{tpu_custom_call.1} parent=0
    #allocation2 [shape = 'u8[8192]{0}', space=vmem, size = 0x2000, scoped, tag = 'input window, operand 0, single buffered']
    #allocation3 [shape = 's32[1]{0}', space=sflag, size = 0x4, scoped, tag = 'scoped memory for tpu_custom_call.1']
    #allocation4 [shape = 's32[1]{0}', space=sflag, size = 0x4, scoped, tag = 'scoped memory for tpu_custom_call.1']
    #allocation5 [shape = 'u8[8192]{0}', space=vmem, size = 0x2000, scoped, tag = 'input window, operand 1, single buffered']
    #allocation6 [shape = 's32[1]{0}', space=sflag, size = 0x4, scoped, tag = 'scoped memory for tpu_custom_call.1']
    #allocation7 [shape = 'u8[4096]{0}', space=vmem, size = 0x1000, scoped, tag = 'output window, operand 0, single buffered']
    #allocation8 [shape = 'u8[4096]{0}', space=vmem, size = 0x1000, scoped, tag = 'output window, operand 1, single buffered']
    #allocation9 [shape = 's32[1]{0}', space=sflag, size = 0x4, scoped, tag = 'scoped memory for tpu_custom_call.1']
    #allocation10 [shape = 'u8[4096]{0}', space=vmem, size = 0x1000, scoped, tag = 'output window, operand 2, single buffered']
    #allocation11 [shape = 'u8[4096]{0}', space=vmem, size = 0x1000, scoped, tag = 'output window, operand 3, single buffered']
    #allocation12 [shape = 's32[1]{0}', space=sflag, size = 0x4, scoped, tag = 'scoped memory for tpu_custom_call.1']
    %11 = vsyncpa [#allocation3], 0
    %12 = vsyncpa [#allocation6], 0
    %13 = vsyncpa [#allocation4], 0
    %14 = vsyncpa [#allocation9], 0
    %15 = vsyncpa [#allocation12], 0
    // Predicated region
    $region2: #{tpu_custom_call.1} parent=1 // pred_check
      _
    $region3: #{tpu_custom_call.1} parent=1 // pred_check_branch
      %17 = sbr.rel (0) target = $region5
    $region4: #{tpu_custom_call.1} parent=1 // pred_region
      %s18 = sadd.s32 0, 0
      %s19 = smul.u32 2, %s18
      %21 = vsyncadd [#allocation3], 0
      %s22 = smul.addr %s19, 8
      %s23 = scalar_lea.hbm %s0, %s22
      %s24 = sshll.u32 %s23, 4
      %s25 = int_to_ptr.hbm [resolvable:$true] %s24
      %s26 = sshll.u32 [#allocation2], 4
      %s27 = int_to_ptr.vmem [resolvable:$true] %s26
      %32 = dma.hbm_to_vmem [thread:$0]  %s25, 256, %s27, [#allocation3], 128, 128, 8
    $region5: #{tpu_custom_call.1} parent=1 // pred_fallthru
      _
    // Predicated region
    $region6: #{tpu_custom_call.1} parent=1 // pred_check
      _
    $region7: #{tpu_custom_call.1} parent=1 // pred_check_branch
      %34 = sbr.rel (0) target = $region9
    $region8: #{tpu_custom_call.1} parent=1 // pred_region
      %s35 = sadd.s32 0, 0
      %s36 = smul.u32 2, %s35
      %38 = vsyncadd [#allocation6], 0
      %s39 = smul.addr %s36, 8
      %s40 = scalar_lea.hbm %s1, %s39
      %s41 = sshll.u32 %s40, 4
      %s42 = int_to_ptr.hbm [resolvable:$true] %s41
      %s43 = sshll.u32 [#allocation5], 4
      %s44 = int_to_ptr.vmem [resolvable:$true] %s43
      %49 = dma.hbm_to_vmem [thread:$0]  %s42, 256, %s44, [#allocation6], 128, 128, 8
    $region9: #{tpu_custom_call.1} parent=1 // pred_fallthru
      _
    // Predicated region
    $region10: #{tpu_custom_call.1} parent=1 // pred_check
      _
    $region11: #{tpu_custom_call.1} parent=1 // pred_check_branch
      %51 = sbr.rel (0) target = $region13
    $region12: #{tpu_custom_call.1} parent=1 // pred_region
      %53 = dma.done [#allocation3], 256
    $region13: #{tpu_custom_call.1} parent=1 // pred_fallthru
      _
    // Predicated region
    $region14: #{tpu_custom_call.1} parent=1 // pred_check
      _
    $region15: #{tpu_custom_call.1} parent=1 // pred_check_branch
      %55 = sbr.rel (0) target = $region17
    $region16: #{tpu_custom_call.1} parent=1 // pred_region
      %57 = dma.done [#allocation6], 256
    $region17: #{tpu_custom_call.1} parent=1 // pred_fallthru
      _
    %s58 = sadd.s32 0, 0
    %s59 = smul.u32 2, %s58
    %s60 = sadd.s32 0, 0
    %s61 = smul.u32 2, %s60
    %p62 = scmp.eq.s32.totalorder 0, 0
    // Predicated region
    $region18: #{tpu_custom_call.1} parent=1 // pred_check
      %p63 = pneg %p62
    $region19: #{tpu_custom_call.1} parent=1 // pred_check_branch
      %65 = sbr.rel (%p63) target = $region21
    $region20: #{tpu_custom_call.1} parent=1 // pred_region
      %66 = vst [vmem:[#allocation7] sm:$0xff] 0.0
      %67 = vst [vmem:[#allocation8] sm:$0xff] 0.0
      %68 = vst [vmem:[#allocation10] sm:$0xff] 0.0
      %69 = vst [vmem:[#allocation11] sm:$0xff] 0.0
    $region21: #{tpu_custom_call.1} parent=1 // pred_fallthru
      _
    %v70 = vld [vmem:[#allocation2] sm:$0xff]
    %v71 = vld [vmem:[#allocation2 + $0x8] sm:$0xff]
    %v72 = vld [vmem:[#allocation5] sm:$0xff]
    %v73 = vld [vmem:[#allocation5 + $0x8] sm:$0xff]
    %v74 = vand.u32 2147483647, %v70
    %v75 = vand.u32 2147483647, %v71
    %v76 = vsub.f32 0.0, %v74
    %v77 = vsub.f32 0.0, %v75
    %v78 = vmul.f32 %v76, 1.442695
    %v79 = vpow.pop %v78
    %v80 = vmul.f32 %v77, 1.442695
    %v81 = vpow.pop %v80
    %v82 = vadd.f32 %v79, 1.0
    %v83 = vadd.f32 %v81, 1.0
    %v84 = vrcp.pop %v82
    %v85 = vmul.f32 %v82, %v84
    %v86 = vsub.f32 1.0, %v85
    %v87 = vmul.f32 %v84, %v86
    %v88 = vadd.f32 %v84, %v87
    %vm89 = vweird.f32 %v82
    %vm90 = vweird.f32 %v84
    %vm91 = vmor %vm89, %vm90
    %v92 = vsel %vm91, %v84, %v88
    %v93 = vand.u32 2147483647, %v82
    %vm94 = vcmp.eq.f32.partialorder %v93, 8.507059e+37
    %v95 = vand.u32 %v82, 2147483648
    %v96 = vor.u32 1.1754944e-38, %v95
    %v97 = vsel %vm94, %v96, %v92
    %v98 = vmul.f32 1.0, %v97
    %v99 = vrcp.pop %v83
    %v100 = vmul.f32 %v83, %v99
    %v101 = vsub.f32 1.0, %v100
    %v102 = vmul.f32 %v99, %v101
    %v103 = vadd.f32 %v99, %v102
    %vm104 = vweird.f32 %v83
    %vm105 = vweird.f32 %v99
    %vm106 = vmor %vm104, %vm105
    %v107 = vsel %vm106, %v99, %v103
    %v108 = vand.u32 2147483647, %v83
    %vm109 = vcmp.eq.f32.partialorder %v108, 8.507059e+37
    %v110 = vand.u32 %v83, 2147483648
    %v111 = vor.u32 1.1754944e-38, %v110
    %v112 = vsel %vm109, %v111, %v107
    %v113 = vmul.f32 1.0, %v112
    %vm114 = vcmp.ge.f32.partialorder %v70, 0.0
    %vm115 = vcmp.ge.f32.partialorder %v71, 0.0
    %v116 = vmul.f32 %v79, %v98
    %v117 = vmul.f32 %v81, %v113
    %v118 = vsel %vm114, %v98, %v116
    %v119 = vsel %vm115, %v113, %v117
    %v120 = vmax.f32 %v70, 0.0
    %v121 = vmax.f32 %v71, 0.0
    %v122 = vmul.f32 %v70, %v72
    %v123 = vmul.f32 %v71, %v73
    %v124 = vsub.f32 %v120, %v122
    %v125 = vsub.f32 %v121, %v123
    %v126 = vadd.f32 %v79, 1.0
    %v127 = vlog2.pop %v126
    %v128 = vmul.f32 %v127, 0.6931472
    %v129 = vmul.f32 -0.5, %v79
    %v130 = vadd.f32 %v129, 1.0
    %v131 = vmul.f32 %v130, %v79
    %v132 = vand.u32 2147483647, %v79
    %vm133 = vcmp.lt.f32.partialorder %v132, 0.0004427343
    %v134 = vsel %vm133, %v131, %v128
    %v135 = vadd.f32 %v81, 1.0
    %v136 = vlog2.pop %v135
    %v137 = vmul.f32 %v136, 0.6931472
    %v138 = vmul.f32 -0.5, %v81
    %v139 = vadd.f32 %v138, 1.0
    %v140 = vmul.f32 %v139, %v81
    %v141 = vand.u32 2147483647, %v81
    %vm142 = vcmp.lt.f32.partialorder %v141, 0.0004427343
    %v143 = vsel %vm142, %v140, %v137
    %v144 = vadd.f32 %v124, %v134
    %v145 = vadd.f32 %v125, %v143
    %v146 = vld [vmem:[#allocation7] sm:$0xff]
    %v147 = vmul.f32 %v118, %v72
    %v148 = vmul.f32 %v119, %v73
    %v149 = vadd.f32 %v147, %v148
    %v150 = vadd.f32 %v146, %v149
    %151 = vst [vmem:[#allocation7] sm:$0xff] %v150
    %v152 = vld [vmem:[#allocation8] sm:$0xff]
    %v153 = vadd.f32 %v118, %v119
    %v154 = vadd.f32 %v152, %v153
    %155 = vst [vmem:[#allocation8] sm:$0xff] %v154
    %v156 = vld [vmem:[#allocation10] sm:$0xff]
    %v157 = vadd.f32 %v72, %v73
    %v158 = vadd.f32 %v156, %v157
    %159 = vst [vmem:[#allocation10] sm:$0xff] %v158
    %v160 = vld [vmem:[#allocation11] sm:$0xff]
    %v161 = vadd.f32 %v144, %v145
    %v162 = vadd.f32 %v160, %v161
    %163 = vst [vmem:[#allocation11] sm:$0xff] %v162
    // Predicated region
    $region22: #{tpu_custom_call.1} parent=1 // pred_check
      _
    $region23: #{tpu_custom_call.1} parent=1 // pred_check_branch
      %165 = sbr.rel (0) target = $region25
    $region24: #{tpu_custom_call.1} parent=1 // pred_region
      %167 = vsyncadd [#allocation4], 0
      %s169 = sshll.u32 [#allocation7], 4
      %s170 = int_to_ptr.vmem [resolvable:$true] %s169
      %s171 = sshll.u32 %s2, 4
      %s172 = int_to_ptr.hbm [resolvable:$true] %s171
      %174 = dma.vmem_to_hbm [thread:$0]  %s170, 128, %s172, [#allocation4]
    $region25: #{tpu_custom_call.1} parent=1 // pred_fallthru
      _
    // Predicated region
    $region26: #{tpu_custom_call.1} parent=1 // pred_check
      _
    $region27: #{tpu_custom_call.1} parent=1 // pred_check_branch
      %176 = sbr.rel (0) target = $region29
    $region28: #{tpu_custom_call.1} parent=1 // pred_region
      %178 = vsyncadd [#allocation9], 0
      %s180 = sshll.u32 [#allocation8], 4
      %s181 = int_to_ptr.vmem [resolvable:$true] %s180
      %s182 = sshll.u32 %s3, 4
      %s183 = int_to_ptr.hbm [resolvable:$true] %s182
      %185 = dma.vmem_to_hbm [thread:$0]  %s181, 128, %s183, [#allocation9]
    $region29: #{tpu_custom_call.1} parent=1 // pred_fallthru
      _
    // Predicated region
    $region30: #{tpu_custom_call.1} parent=1 // pred_check
      _
    $region31: #{tpu_custom_call.1} parent=1 // pred_check_branch
      %187 = sbr.rel (0) target = $region33
    $region32: #{tpu_custom_call.1} parent=1 // pred_region
      %189 = vsyncadd [#allocation9], 0
      %s191 = sshll.u32 [#allocation10], 4
      %s192 = int_to_ptr.vmem [resolvable:$true] %s191
      %s193 = sshll.u32 %s4, 4
      %s194 = int_to_ptr.hbm [resolvable:$true] %s193
      %196 = dma.vmem_to_hbm [thread:$0]  %s192, 128, %s194, [#allocation9]
    $region33: #{tpu_custom_call.1} parent=1 // pred_fallthru
      _
    // Predicated region
    $region34: #{tpu_custom_call.1} parent=1 // pred_check
      _
    $region35: #{tpu_custom_call.1} parent=1 // pred_check_branch
      %198 = sbr.rel (0) target = $region37
    $region36: #{tpu_custom_call.1} parent=1 // pred_region
      %200 = vsyncadd [#allocation12], 0
      %s202 = sshll.u32 [#allocation11], 4
      %s203 = int_to_ptr.vmem [resolvable:$true] %s202
      %s204 = sshll.u32 %s5, 4
      %s205 = int_to_ptr.hbm [resolvable:$true] %s204
      %207 = dma.vmem_to_hbm [thread:$0]  %s203, 128, %s205, [#allocation12]
    $region37: #{tpu_custom_call.1} parent=1 // pred_fallthru
      _
    // Predicated region
    $region38: #{tpu_custom_call.1} parent=1 // pred_check
      _
    $region39: #{tpu_custom_call.1} parent=1 // pred_check_branch
      %209 = sbr.rel (0) target = $region41
    $region40: #{tpu_custom_call.1} parent=1 // pred_region
      %211 = dma.done [#allocation4], 128
    $region41: #{tpu_custom_call.1} parent=1 // pred_fallthru
      _
    // Predicated region
    $region42: #{tpu_custom_call.1} parent=1 // pred_check
      _
    $region43: #{tpu_custom_call.1} parent=1 // pred_check_branch
      %213 = sbr.rel (0) target = $region45
    $region44: #{tpu_custom_call.1} parent=1 // pred_region
      %215 = dma.done [#allocation9], 128
    $region45: #{tpu_custom_call.1} parent=1 // pred_fallthru
      _
    // Predicated region
    $region46: #{tpu_custom_call.1} parent=1 // pred_check
      _
    $region47: #{tpu_custom_call.1} parent=1 // pred_check_branch
      %217 = sbr.rel (0) target = $region49
    $region48: #{tpu_custom_call.1} parent=1 // pred_region
      %219 = dma.done [#allocation9], 128
    $region49: #{tpu_custom_call.1} parent=1 // pred_fallthru
      _
    // Predicated region
    $region50: #{tpu_custom_call.1} parent=1 // pred_check
      _
    $region51: #{tpu_custom_call.1} parent=1 // pred_check_branch
      %221 = sbr.rel (0) target = $region53
    $region52: #{tpu_custom_call.1} parent=1 // pred_region
      %223 = dma.done [#allocation12], 128
    $region53: #{tpu_custom_call.1} parent=1 // pred_fallthru
      _
    %224 = vsyncpa [#allocation3], 1
    %225 = vsyncpa [#allocation6], 1
    %226 = vsyncpa [#allocation4], 1
    %227 = vsyncpa [#allocation9], 1
    %228 = vsyncpa [#allocation12], 1

</llo_original>
